<compile_context>
chip_gen: v7x
topology: tpu7x:2x2x1
jax: 0.10.0
libtpu: 0.0.40
codegen_flags: <defaults>
</compile_context>

<pallas_src>
import functools

import jax
import jax.numpy as jnp
from jax.experimental import pallas as pl
from jax.experimental.pallas import tpu as pltpu


def _round_up(a, m):
    return ((a + m - 1) // m) * m


def _av_fusion_kernel(vis_ref, aud_ref, wv_ref, wa_ref, b_ref,
                      x_ref, y_ref, out_ref, acc_ref, *, inv_sx, inv_sy):
    # vis_ref: (B, TS, C)   one Sx-tile of visual features (bf16)
    # aud_ref: (B, Sy, C)   full audio features (tiny, resident)
    # wv_ref:  (C, NPAD)    fc_ weight rows for the visual half (f32)
    # wa_ref:  (C, NPAD)    fc_ weight rows for the audio  half (f32)
    # b_ref:   (1, NPAD)    fc_ bias (f32, lane-padded)
    # acc_ref: (B, C) f32   running sum over Sx tiles
    k = pl.program_id(0)
    nk = pl.num_programs(0)

    @pl.when(k == 0)
    def _():
        acc_ref[...] = jnp.zeros_like(acc_ref)

    # Per-tile partial sum (f32 accumulation); hidden under the next tile's DMA.
    acc_ref[...] += jnp.sum(vis_ref[...].astype(jnp.float32), axis=1)

    @pl.when(k == nk - 1)
    def _():
        # adaptive_avg_pool3d(x, 1): divide the accumulated sum by the true Sx
        # (zero-padded rows contribute nothing to the sum).
        x = acc_ref[...] * inv_sx                                        # (B, C)
        # adaptive_avg_pool2d(y, 1)
        y = jnp.sum(aud_ref[...].astype(jnp.float32), axis=1) * inv_sy   # (B, C)

        x_ref[...] = x
        y_ref[...] = y

        # fc_(cat(x, y)) == x @ w_vis + y @ w_aud + b   (no lane-axis concat)
        out_ref[...] = (
            jnp.dot(x, wv_ref[...], preferred_element_type=jnp.float32)
            + jnp.dot(y, wa_ref[...], preferred_element_type=jnp.float32)
            + b_ref[...]
        )


def avmodel_forward(audio_feat, visual_feat, w_fc, b_fc, *, tile_rows=512):
    """Fusion head of AVmodel.

    audio_feat:  (B, Ha, Wa, C)    channels-last audio backbone features
    visual_feat: (B, T, Hv, Wv, C) channels-last visual backbone features
    w_fc: (n_classes, 2C) torch-layout fc_ weight;  b_fc: (n_classes,) bias
    Returns (x, y, out) exactly like AVmodel.forward.
    """
    B, Ha, Wa, C = audio_feat.shape
    Bv, T, Hv, Wv, Cv = visual_feat.shape
    assert Bv == B and Cv == C
    n_classes = w_fc.shape[0]
    assert w_fc.shape[1] == 2 * C

    Sx = T * Hv * Wv
    Sy = Ha * Wa

    # --- choose the Sx tile: balanced tiles, sublane (8) aligned ---
    num_tiles = pl.cdiv(Sx, tile_rows)
    TS = _round_up(pl.cdiv(Sx, num_tiles), 8)
    Sx_pad = TS * num_tiles

    # Free reshapes (channels-last already); keep HBM dtype as provided (bf16).
    vis = visual_feat.reshape(B, Sx, C)
    aud = audio_feat.reshape(B, Sy, C)
    if Sx_pad != Sx:
        vis = jnp.pad(vis, ((0, 0), (0, Sx_pad - Sx), (0, 0)))

    # --- fc_ params: split visual/audio halves, pad n_classes to 128 lanes ---
    NPAD = max(128, _round_up(n_classes, 128))
    w = jnp.asarray(w_fc, jnp.float32).T                       # (2C, n_classes)
    w_vis = jnp.zeros((C, NPAD), jnp.float32).at[:, :n_classes].set(w[:C])
    w_aud = jnp.zeros((C, NPAD), jnp.float32).at[:, :n_classes].set(w[C:])
    b = jnp.zeros((1, NPAD), jnp.float32).at[0, :n_classes].set(
        jnp.asarray(b_fc, jnp.float32))

    kernel = functools.partial(_av_fusion_kernel,
                               inv_sx=1.0 / float(Sx),
                               inv_sy=1.0 / float(Sy))

    grid_spec = pltpu.PrefetchScalarGridSpec(
        num_scalar_prefetch=0,
        grid=(num_tiles,),
        in_specs=[
            pl.BlockSpec((B, TS, C), lambda k: (0, k, 0)),      # vis tile
            pl.BlockSpec((B, Sy, C), lambda k: (0, 0, 0)),      # aud (resident)
            pl.BlockSpec((C, NPAD), lambda k: (0, 0)),          # w_vis (resident)
            pl.BlockSpec((C, NPAD), lambda k: (0, 0)),          # w_aud (resident)
            pl.BlockSpec((1, NPAD), lambda k: (0, 0)),          # bias (resident)
        ],
        out_specs=[
            pl.BlockSpec((B, C), lambda k: (0, 0)),             # x
            pl.BlockSpec((B, C), lambda k: (0, 0)),             # y
            pl.BlockSpec((B, NPAD), lambda k: (0, 0)),          # out (padded)
        ],
        scratch_shapes=[pltpu.VMEM((B, C), jnp.float32)],       # running sum
    )

    itemsize_vis = jnp.dtype(vis.dtype).itemsize
    itemsize_aud = jnp.dtype(aud.dtype).itemsize
    bytes_accessed = (
        B * Sx_pad * C * itemsize_vis + B * Sy * C * itemsize_aud
        + 2 * C * NPAD * 4 + NPAD * 4
        + 2 * B * C * 4 + B * NPAD * 4
    )
    cost = pl.CostEstimate(
        flops=2 * B * 2 * C * NPAD + B * (Sx + Sy) * C,
        transcendentals=0,
        bytes_accessed=bytes_accessed,
    )

    # TODO(synk): on v7x a leading PARALLEL grid axis (split Sx or B across the
    #             2 TensorCores with partial-sum combine) would use both cores;
    #             omitted here to keep the single-accumulator reduction simple.
    x, y, out_pad = pl.pallas_call(
        kernel,
        out_shape=(
            jax.ShapeDtypeStruct((B, C), jnp.float32),
            jax.ShapeDtypeStruct((B, C), jnp.float32),
            jax.ShapeDtypeStruct((B, NPAD), jnp.float32),
        ),
        grid_spec=grid_spec,
        compiler_params=pltpu.CompilerParams(
            dimension_semantics=("arbitrary",)),
        cost_estimate=cost,
    )(vis, aud, w_vis, w_aud, b)

    return x, y, out_pad[:, :n_classes]


if __name__ == "__main__":
    # Small deterministic shapes consistent with the module:
    # fc_ is Linear(1024, n_classes) => backbone feature channels C = 512.
    B, T, C = 2, 4, 512
    Ha, Wa = 4, 4          # audio backbone spatial output
    Hv, Wv = 4, 4          # visual backbone spatial output
    n_classes = 2

    key = jax.random.PRNGKey(0)
    k_aud, k_vis, k_w, k_b = jax.random.split(key, 4)

    # Backbone features kept in bf16 in HBM (channels-last).
    audio_feat = jax.random.normal(k_aud, (B, Ha, Wa, C), jnp.float32
                                   ).astype(jnp.bfloat16)
    visual_feat = jax.random.normal(k_vis, (B, T, Hv, Wv, C), jnp.float32
                                    ).astype(jnp.bfloat16)
    # fc_ parameters (deterministic synthetic init; torch layout (out, in))
    w_fc = 0.02 * jax.random.normal(k_w, (n_classes, 2 * C), jnp.float32)
    b_fc = 0.01 * jax.random.normal(k_b, (n_classes,), jnp.float32)

    # tile_rows=32 forces a multi-step grid (Sx=64 -> 2 tiles) so the
    # init / accumulate / finalize path is exercised.
    x, y, out = avmodel_forward(audio_feat, visual_feat, w_fc, b_fc,
                                tile_rows=32)
    jax.block_until_ready((x, y, out))

    # Pure-JAX reference of the exact forward semantics (f32 math on the same
    # bf16 feature values).
    vis_f32 = visual_feat.astype(jnp.float32)
    aud_f32 = audio_feat.astype(jnp.float32)
    x_ref = jnp.mean(vis_f32, axis=(1, 2, 3))                    # (B, C)
    y_ref = jnp.mean(aud_f32, axis=(1, 2))                       # (B, C)
    out_ref = (jnp.dot(jnp.concatenate([x_ref, y_ref], axis=1), w_fc.T,
                       precision=jax.lax.Precision.HIGHEST)
               + b_fc)

    assert jnp.allclose(x, x_ref, atol=1e-4), float(jnp.abs(x - x_ref).max())
    assert jnp.allclose(y, y_ref, atol=1e-4), float(jnp.abs(y - y_ref).max())
    assert jnp.allclose(out, out_ref, atol=2e-3, rtol=1e-2), \
        float(jnp.abs(out - out_ref).max())

    print("KERNEL_OK")
</pallas_src>

<mosaic_0001>
module attributes {stable_mosaic.version = 11 : i64} {
  func.func @_av_fusion_kernel(%arg0: i32, %arg1: memref<2x32x512xbf16, #tpu.memory_space<vmem>>, %arg2: memref<2x16x512xbf16, #tpu.memory_space<vmem>>, %arg3: memref<512x128xf32, #tpu.memory_space<vmem>>, %arg4: memref<512x128xf32, #tpu.memory_space<vmem>>, %arg5: memref<1x128xf32, #tpu.memory_space<vmem>>, %arg6: memref<2x512xf32, #tpu.memory_space<vmem>>, %arg7: memref<2x512xf32, #tpu.memory_space<vmem>>, %arg8: memref<2x128xf32, #tpu.memory_space<vmem>>, %arg9: memref<2x512xf32, #tpu.memory_space<vmem>>) attributes {dimension_semantics = [#tpu.dimension_semantics<arbitrary>], iteration_bounds = array<i64: 2>, scalar_prefetch = 0 : i64, scratch_operands = 1 : i64, tpu.core_type = #tpu.core_type<tc>, window_params = [{transform_indices = @transform_0, window_bounds = array<i64: 2, 32, 512>}, {pipeline_mode = #tpu.pipeline_mode<synchronous>, transform_indices = @transform_1, window_bounds = array<i64: 2, 16, 512>}, {pipeline_mode = #tpu.pipeline_mode<synchronous>, transform_indices = @transform_2, window_bounds = array<i64: 512, 128>}, {pipeline_mode = #tpu.pipeline_mode<synchronous>, transform_indices = @transform_3, window_bounds = array<i64: 512, 128>}, {pipeline_mode = #tpu.pipeline_mode<synchronous>, transform_indices = @transform_4, window_bounds = array<i64: 1, 128>}, {pipeline_mode = #tpu.pipeline_mode<synchronous>, transform_indices = @transform_5, window_bounds = array<i64: 2, 512>}, {pipeline_mode = #tpu.pipeline_mode<synchronous>, transform_indices = @transform_6, window_bounds = array<i64: 2, 512>}, {pipeline_mode = #tpu.pipeline_mode<synchronous>, transform_indices = @transform_7, window_bounds = array<i64: 2, 128>}]} {
    %c0_i32 = arith.constant 0 : i32
    %0 = arith.cmpi eq, %arg0, %c0_i32 : i32
    %1 = arith.extui %0 : i1 to i32
    %c0_i32_0 = arith.constant 0 : i32
    %2 = arith.cmpi ne, %1, %c0_i32_0 : i32
    scf.if %2 {
      %cst_8 = arith.constant 0.000000e+00 : f32
      %12 = vector.broadcast %cst_8 : f32 to vector<2x512xf32>
      %c0_9 = arith.constant 0 : index
      %c0_10 = arith.constant 0 : index
      %13 = vector.load %arg9[%c0_9, %c0_10] : memref<2x512xf32, #tpu.memory_space<vmem>>, vector<2x512xf32>
      tpu.vector_store %arg9[%c0_9, %c0_10], %12 {strides = array<i32>} : memref<2x512xf32, #tpu.memory_space<vmem>>, vector<2x512xf32>,
    } else {
    }
    %c0 = arith.constant 0 : index
    %c0_1 = arith.constant 0 : index
    %3 = vector.load %arg9[%c0, %c0_1] : memref<2x512xf32, #tpu.memory_space<vmem>>, vector<2x512xf32>
    %c0_2 = arith.constant 0 : index
    %c0_3 = arith.constant 0 : index
    %c0_4 = arith.constant 0 : index
    %4 = vector.load %arg1[%c0_2, %c0_3, %c0_4] : memref<2x32x512xbf16, #tpu.memory_space<vmem>>, vector<2x32x512xbf16>
    %5 = arith.extf %4 : vector<2x32x512xbf16> to vector<2x32x512xf32>
    %cst = arith.constant dense<0.000000e+00> : vector<2x512xf32>
    %6 = vector.multi_reduction <add>, %5, %cst [1] : vector<2x32x512xf32> to vector<2x512xf32>
    %7 = arith.addf %3, %6 : vector<2x512xf32>
    %c0_5 = arith.constant 0 : index
    %c0_6 = arith.constant 0 : index
    %8 = vector.load %arg9[%c0_5, %c0_6] : memref<2x512xf32, #tpu.memory_space<vmem>>, vector<2x512xf32>
    tpu.vector_store %arg9[%c0_5, %c0_6], %7 {strides = array<i32>} : memref<2x512xf32, #tpu.memory_space<vmem>>, vector<2x512xf32>,
    %c1_i32 = arith.constant 1 : i32
    %9 = arith.cmpi eq, %arg0, %c1_i32 : i32
    %10 = arith.extui %9 : i1 to i32
    %c0_i32_7 = arith.constant 0 : i32
    %11 = arith.cmpi ne, %10, %c0_i32_7 : i32
    scf.if %11 {
      %c0_8 = arith.constant 0 : index
      %c0_9 = arith.constant 0 : index
      %12 = vector.load %arg9[%c0_8, %c0_9] : memref<2x512xf32, #tpu.memory_space<vmem>>, vector<2x512xf32>
      %cst_10 = arith.constant 1.562500e-02 : f32
      %13 = vector.broadcast %cst_10 : f32 to vector<2x512xf32>
      %14 = arith.mulf %12, %13 : vector<2x512xf32>
      %c0_11 = arith.constant 0 : index
      %c0_12 = arith.constant 0 : index
      %c0_13 = arith.constant 0 : index
      %15 = vector.load %arg2[%c0_11, %c0_12, %c0_13] : memref<2x16x512xbf16, #tpu.memory_space<vmem>>, vector<2x16x512xbf16>
      %16 = arith.extf %15 : vector<2x16x512xbf16> to vector<2x16x512xf32>
      %cst_14 = arith.constant dense<0.000000e+00> : vector<2x512xf32>
      %17 = vector.multi_reduction <add>, %16, %cst_14 [1] : vector<2x16x512xf32> to vector<2x512xf32>
      %cst_15 = arith.constant 6.250000e-02 : f32
      %18 = vector.broadcast %cst_15 : f32 to vector<2x512xf32>
      %19 = arith.mulf %17, %18 : vector<2x512xf32>
      %c0_16 = arith.constant 0 : index
      %c0_17 = arith.constant 0 : index
      %20 = vector.load %arg6[%c0_16, %c0_17] : memref<2x512xf32, #tpu.memory_space<vmem>>, vector<2x512xf32>
      tpu.vector_store %arg6[%c0_16, %c0_17], %14 {strides = array<i32>} : memref<2x512xf32, #tpu.memory_space<vmem>>, vector<2x512xf32>,
      %c0_18 = arith.constant 0 : index
      %c0_19 = arith.constant 0 : index
      %21 = vector.load %arg7[%c0_18, %c0_19] : memref<2x512xf32, #tpu.memory_space<vmem>>, vector<2x512xf32>
      tpu.vector_store %arg7[%c0_18, %c0_19], %19 {strides = array<i32>} : memref<2x512xf32, #tpu.memory_space<vmem>>, vector<2x512xf32>,
      %c0_20 = arith.constant 0 : index
      %c0_21 = arith.constant 0 : index
      %22 = vector.load %arg3[%c0_20, %c0_21] : memref<512x128xf32, #tpu.memory_space<vmem>>, vector<512x128xf32>
      %cst_22 = arith.constant dense<0.000000e+00> : vector<2x128xf32>
      %23 = tpu.matmul %14, %22, %cst_22 {dimension_numbers = #tpu.dot_dimension_numbers<[1], [0], [0], [1], [0, 0, 1, 1], [], []>} : vector<2x512xf32>, vector<512x128xf32>, vector<2x128xf32> -> vector<2x128xf32>
      %c0_23 = arith.constant 0 : index
      %c0_24 = arith.constant 0 : index
      %24 = vector.load %arg4[%c0_23, %c0_24] : memref<512x128xf32, #tpu.memory_space<vmem>>, vector<512x128xf32>
      %cst_25 = arith.constant dense<0.000000e+00> : vector<2x128xf32>
      %25 = tpu.matmul %19, %24, %cst_25 {dimension_numbers = #tpu.dot_dimension_numbers<[1], [0], [0], [1], [0, 0, 1, 1], [], []>} : vector<2x512xf32>, vector<512x128xf32>, vector<2x128xf32> -> vector<2x128xf32>
      %26 = arith.addf %23, %25 : vector<2x128xf32>
      %c0_26 = arith.constant 0 : index
      %c0_27 = arith.constant 0 : index
      %27 = vector.load %arg5[%c0_26, %c0_27] : memref<1x128xf32, #tpu.memory_space<vmem>>, vector<1x128xf32>
      %28 = vector.broadcast %27 : vector<1x128xf32> to vector<2x128xf32>
      %29 = arith.addf %26, %28 : vector<2x128xf32>
      %c0_28 = arith.constant 0 : index
      %c0_29 = arith.constant 0 : index
      %30 = vector.load %arg8[%c0_28, %c0_29] : memref<2x128xf32, #tpu.memory_space<vmem>>, vector<2x128xf32>
      tpu.vector_store %arg8[%c0_28, %c0_29], %29 {strides = array<i32>} : memref<2x128xf32, #tpu.memory_space<vmem>>, vector<2x128xf32>,
    } else {
    }
    return
  }
  func.func @transform_0(%arg0: i32) -> (i32, i32, i32) {
    %c0_i32 = arith.constant 0 : i32
    %c0_i32_0 = arith.constant 0 : i32
    %c0_i32_1 = arith.constant 0 : i32
    return %c0_i32, %arg0, %c0_i32_0 : i32, i32, i32
  }
  func.func @transform_1(%arg0: i32) -> (i32, i32, i32) {
    %c0_i32 = arith.constant 0 : i32
    %c0_i32_0 = arith.constant 0 : i32
    %c0_i32_1 = arith.constant 0 : i32
    %c0_i32_2 = arith.constant 0 : i32
    return %c0_i32, %c0_i32_0, %c0_i32_1 : i32, i32, i32
  }
  func.func @transform_2(%arg0: i32) -> (i32, i32) {
    %c0_i32 = arith.constant 0 : i32
    %c0_i32_0 = arith.constant 0 : i32
    %c0_i32_1 = arith.constant 0 : i32
    return %c0_i32, %c0_i32_0 : i32, i32
  }
  func.func @transform_3(%arg0: i32) -> (i32, i32) {
    %c0_i32 = arith.constant 0 : i32
    %c0_i32_0 = arith.constant 0 : i32
    %c0_i32_1 = arith.constant 0 : i32
    return %c0_i32, %c0_i32_0 : i32, i32
  }
  func.func @transform_4(%arg0: i32) -> (i32, i32) {
    %c0_i32 = arith.constant 0 : i32
    %c0_i32_0 = arith.constant 0 : i32
    %c0_i32_1 = arith.constant 0 : i32
    return %c0_i32, %c0_i32_0 : i32, i32
  }
  func.func @transform_5(%arg0: i32) -> (i32, i32) {
    %c0_i32 = arith.constant 0 : i32
    %c0_i32_0 = arith.constant 0 : i32
    %c0_i32_1 = arith.constant 0 : i32
    return %c0_i32, %c0_i32_0 : i32, i32
  }
  func.func @transform_6(%arg0: i32) -> (i32, i32) {
    %c0_i32 = arith.constant 0 : i32
    %c0_i32_0 = arith.constant 0 : i32
    %c0_i32_1 = arith.constant 0 : i32
    return %c0_i32, %c0_i32_0 : i32, i32
  }
  func.func @transform_7(%arg0: i32) -> (i32, i32) {
    %c0_i32 = arith.constant 0 : i32
    %c0_i32_0 = arith.constant 0 : i32
    %c0_i32_1 = arith.constant 0 : i32
    return %c0_i32, %c0_i32_0 : i32, i32
  }
}

</mosaic_0001>

<llo_original>
// kernel: tpu_custom_call.1
$region0: #{tpu_custom_call.1}
  #allocation0 [shape = 'u32[]', space=smem, size = 0x4, offset = 0x4, fixed_abs, tag = 'smem constant byte address 0x4 - core index']
  #allocation1 [shape = 'u32[144,128]{1,0:T(1,128)}', space=vmem, size = 0x12000, scoped, tag = 'internal scratch']
  #allocation2 [shape = 'f32[2,512]{1,0:T(2,128)}', space=vmem, size = 0x1000, scoped, tag = 'scratch operand']
  #allocation15 [shape = 's32[]', space=sflag, size = 0x4, offset = 0, fixed_abs, tag = 'sflag constant byte address 0x0 - dummy sync flag']
  %s0 = inlined_call_operand.hbm [shape: bf16[2,64,512], index: 0, kind: input, shape index: {}]
  %s1 = inlined_call_operand.hbm [shape: bf16[2,16,512], index: 1, kind: input, shape index: {}]
  %s2 = inlined_call_operand.hbm [shape: f32[512,128], index: 2, kind: input, shape index: {}]
  %s3 = inlined_call_operand.hbm [shape: f32[512,128], index: 3, kind: input, shape index: {}]
  %s4 = inlined_call_operand.vmem [shape: f32[1,128], index: 4, kind: input, shape index: {}]
  %s5 = inlined_call_operand.hbm [shape: f32[2,512], index: 5, kind: output, shape index: {0}]
  %s6 = inlined_call_operand.hbm [shape: f32[2,512], index: 6, kind: output, shape index: {1}]
  %s7 = inlined_call_operand.hbm [shape: f32[2,128], index: 7, kind: output, shape index: {2}]
  %8 = xla_tuple %s5, %s6, %s7
  %s9 = sld [smem:[#allocation0]]
  $region93: #{tpu_custom_call.1} parent=0
    _
  %s11 = ssub.s32 1, %s9
  %s12 = scalar_select 0, %s11, %s9
  $region1: #{tpu_custom_call.1} parent=0
    #allocation3 [shape = 'u8[131072]{0}', space=vmem, size = 0x20000, scoped, tag = 'input window, operand 0']
    #allocation4 [shape = 's32[2]{0}', space=sflag, size = 0x8, scoped, tag = 'scoped memory for tpu_custom_call.1']
    #allocation5 [shape = 's32[2]{0}', space=sflag, size = 0x8, scoped, tag = 'scoped memory for tpu_custom_call.1']
    #allocation6 [shape = 'u8[32768]{0}', space=vmem, size = 0x8000, scoped, tag = 'input window, operand 1, single buffered']
    #allocation7 [shape = 's32[1]{0}', space=sflag, size = 0x4, scoped, tag = 'scoped memory for tpu_custom_call.1']
    #allocation8 [shape = 'u8[262144]{0}', space=vmem, size = 0x40000, scoped, tag = 'input window, operand 2, single buffered']
    #allocation9 [shape = 'u8[262144]{0}', space=vmem, size = 0x40000, scoped, tag = 'input window, operand 3, single buffered']
    #allocation10 [shape = 's32[1]{0}', space=sflag, size = 0x4, scoped, tag = 'scoped memory for tpu_custom_call.1']
    #allocation11 [shape = 'u8[4096]{0}', space=vmem, size = 0x1000, scoped, tag = 'output window, operand 0, single buffered']
    #allocation12 [shape = 'u8[4096]{0}', space=vmem, size = 0x1000, scoped, tag = 'output window, operand 1, single buffered']
    #allocation13 [shape = 's32[1]{0}', space=sflag, size = 0x4, scoped, tag = 'scoped memory for tpu_custom_call.1']
    #allocation14 [shape = 'u8[1024]{0}', space=vmem, size = 0x400, scoped, tag = 'output window, operand 2, single buffered']
    %13 = vsyncpa [#allocation4], 0
    %s14 = scalar_lea.sflag [#allocation4], 1
    %15 = vsyncpa %s14, 0
    %16 = vsyncpa [#allocation7], 0
    %17 = vsyncpa [#allocation10], 0
    %18 = vsyncpa [#allocation5], 0
    %19 = vsyncpa [#allocation13], 0
    loop: start=0, step=1, limit=4
    $region2: #{tpu_custom_call.1} parent=1 // loop_pre_header
      _
    $region3: #{tpu_custom_call.1} parent=1 // loop_header
      %s21 = sphi 0, %s25
      %p22 = scmp.ge.s32.totalorder %s21, 4
      %s31 = sphi 0, %s33
      %s34 = sphi 0, %s31
      %s35 = sphi 0, %s34
      %s51 = sphi 0, %s35
      %s55 = sphi 0, %s55
      %s57 = sphi 0, %s55
      %s58 = sphi 0, %s57
      %s72 = sphi 0, %s58
      %s76 = sphi 0, %s76
      %s78 = sphi 0, %s76
      %s79 = sphi 0, %s78
      %s93 = sphi 0, %s79
      %s97 = sphi 0, %s97
      %s99 = sphi 0, %s97
      %s100 = sphi 0, %s99
      %s114 = sphi 0, %s100
      %s118 = sphi 0, %s118
      %s120 = sphi 0, %s118
      %s121 = sphi 0, %s120
      %s135 = sphi 0, %s121
      %s139 = sphi 0, %s139
      %s141 = sphi 0, %s139
      %s142 = sphi 0, %s141
      %s156 = sphi 0, %s142
      %s160 = sphi 0, %s160
      %s162 = sphi 0, %s160
      %s163 = sphi 0, %s162
      %s177 = sphi 0, %s163
      %s181 = sphi 0, %s181
      %s183 = sphi 0, %s181
      %s184 = sphi 0, %s183
      %s198 = sphi 0, %s184
    $region4: #{tpu_custom_call.1} parent=1 // loop_header_branch
      %24 = sbr.rel (%p22) target = $region8
    $region5: #{tpu_custom_call.1} parent=1 // loop_body
      %s26 = ssub.s32 %s21, 1
      %s27 = ssub.s32 %s21, 2
      %s28 = sadd.s32 %s21, 1
      %s29 = ssub.s32 %s21, %s28
      %p30 = scmp.eq.s32.totalorder %s29, 0
      %s32 = sadd.s32 %s31, 1
      %s33 = scalar_select %p30, %s31, %s32
      %p36 = pneg %p30
      %p37 = scmp.eq.s32.totalorder %s21, 1
      %p38 = por %p36, %p37
      %p39 = scmp.ne.s32.totalorder %s31, %s34
      %p40 = scmp.eq.s32.totalorder %s21, 0
      %p41 = por %p39, %p40
      %p42 = scmp.ne.s32.totalorder %s31, %s34
      %p43 = scmp.eq.s32.totalorder %s26, 1
      %p44 = por %p42, %p43
      %p45 = scmp.ne.s32.totalorder %s34, %s35
      %p46 = scmp.eq.s32.totalorder %s26, 0
      %p47 = por %p45, %p46
      %p48 = scmp.ne.s32.totalorder %s34, %s35
      %p49 = scmp.eq.s32.totalorder %s27, 1
      %p50 = por %p48, %p49
      %p52 = scmp.ne.s32.totalorder %s35, %s51
      %p53 = scmp.eq.s32.totalorder %s27, 0
      %p54 = por %p52, %p53
      %s56 = sadd.s32 %s55, 1
      %p59 = scmp.eq.s32.totalorder %s21, 1
      %p60 = scmp.ne.s32.totalorder %s55, %s57
      %p61 = scmp.eq.s32.totalorder %s21, 0
      %p62 = por %p60, %p61
      %p63 = scmp.ne.s32.totalorder %s55, %s57
      %p64 = scmp.eq.s32.totalorder %s26, 1
      %p65 = por %p63, %p64
      %p66 = scmp.ne.s32.totalorder %s57, %s58
      %p67 = scmp.eq.s32.totalorder %s26, 0
      %p68 = por %p66, %p67
      %p69 = scmp.ne.s32.totalorder %s57, %s58
      %p70 = scmp.eq.s32.totalorder %s27, 1
      %p71 = por %p69, %p70
      %p73 = scmp.ne.s32.totalorder %s58, %s72
      %p74 = scmp.eq.s32.totalorder %s27, 0
      %p75 = por %p73, %p74
      %s77 = sadd.s32 %s76, 1
      %p80 = scmp.eq.s32.totalorder %s21, 1
      %p81 = scmp.ne.s32.totalorder %s76, %s78
      %p82 = scmp.eq.s32.totalorder %s21, 0
      %p83 = por %p81, %p82
      %p84 = scmp.ne.s32.totalorder %s76, %s78
      %p85 = scmp.eq.s32.totalorder %s26, 1
      %p86 = por %p84, %p85
      %p87 = scmp.ne.s32.totalorder %s78, %s79
      %p88 = scmp.eq.s32.totalorder %s26, 0
      %p89 = por %p87, %p88
      %p90 = scmp.ne.s32.totalorder %s78, %s79
      %p91 = scmp.eq.s32.totalorder %s27, 1
      %p92 = por %p90, %p91
      %p94 = scmp.ne.s32.totalorder %s79, %s93
      %p95 = scmp.eq.s32.totalorder %s27, 0
      %p96 = por %p94, %p95
      %s98 = sadd.s32 %s97, 1
      %p101 = scmp.eq.s32.totalorder %s21, 1
      %p102 = scmp.ne.s32.totalorder %s97, %s99
      %p103 = scmp.eq.s32.totalorder %s21, 0
      %p104 = por %p102, %p103
      %p105 = scmp.ne.s32.totalorder %s97, %s99
      %p106 = scmp.eq.s32.totalorder %s26, 1
      %p107 = por %p105, %p106
      %p108 = scmp.ne.s32.totalorder %s99, %s100
      %p109 = scmp.eq.s32.totalorder %s26, 0
      %p110 = por %p108, %p109
      %p111 = scmp.ne.s32.totalorder %s99, %s100
      %p112 = scmp.eq.s32.totalorder %s27, 1
      %p113 = por %p111, %p112
      %p115 = scmp.ne.s32.totalorder %s100, %s114
      %p116 = scmp.eq.s32.totalorder %s27, 0
      %p117 = por %p115, %p116
      %s119 = sadd.s32 %s118, 1
      %p122 = scmp.eq.s32.totalorder %s21, 1
      %p123 = scmp.ne.s32.totalorder %s118, %s120
      %p124 = scmp.eq.s32.totalorder %s21, 0
      %p125 = por %p123, %p124
      %p126 = scmp.ne.s32.totalorder %s118, %s120
      %p127 = scmp.eq.s32.totalorder %s26, 1
      %p128 = por %p126, %p127
      %p129 = scmp.ne.s32.totalorder %s120, %s121
      %p130 = scmp.eq.s32.totalorder %s26, 0
      %p131 = por %p129, %p130
      %p132 = scmp.ne.s32.totalorder %s120, %s121
      %p133 = scmp.eq.s32.totalorder %s27, 1
      %p134 = por %p132, %p133
      %p136 = scmp.ne.s32.totalorder %s121, %s135
      %p137 = scmp.eq.s32.totalorder %s27, 0
      %p138 = por %p136, %p137
      %s140 = sadd.s32 %s139, 1
      %p143 = scmp.eq.s32.totalorder %s21, 1
      %p144 = scmp.ne.s32.totalorder %s139, %s141
      %p145 = scmp.eq.s32.totalorder %s21, 0
      %p146 = por %p144, %p145
      %p147 = scmp.ne.s32.totalorder %s139, %s141
      %p148 = scmp.eq.s32.totalorder %s26, 1
      %p149 = por %p147, %p148
      %p150 = scmp.ne.s32.totalorder %s141, %s142
      %p151 = scmp.eq.s32.totalorder %s26, 0
      %p152 = por %p150, %p151
      %p153 = scmp.ne.s32.totalorder %s141, %s142
      %p154 = scmp.eq.s32.totalorder %s27, 1
      %p155 = por %p153, %p154
      %p157 = scmp.ne.s32.totalorder %s142, %s156
      %p158 = scmp.eq.s32.totalorder %s27, 0
      %p159 = por %p157, %p158
      %s161 = sadd.s32 %s160, 1
      %p164 = scmp.eq.s32.totalorder %s21, 1
      %p165 = scmp.ne.s32.totalorder %s160, %s162
      %p166 = scmp.eq.s32.totalorder %s21, 0
      %p167 = por %p165, %p166
      %p168 = scmp.ne.s32.totalorder %s160, %s162
      %p169 = scmp.eq.s32.totalorder %s26, 1
      %p170 = por %p168, %p169
      %p171 = scmp.ne.s32.totalorder %s162, %s163
      %p172 = scmp.eq.s32.totalorder %s26, 0
      %p173 = por %p171, %p172
      %p174 = scmp.ne.s32.totalorder %s162, %s163
      %p175 = scmp.eq.s32.totalorder %s27, 1
      %p176 = por %p174, %p175
      %p178 = scmp.ne.s32.totalorder %s163, %s177
      %p179 = scmp.eq.s32.totalorder %s27, 0
      %p180 = por %p178, %p179
      %s182 = sadd.s32 %s181, 1
      %p185 = scmp.eq.s32.totalorder %s21, 1
      %p186 = scmp.ne.s32.totalorder %s181, %s183
      %p187 = scmp.eq.s32.totalorder %s21, 0
      %p188 = por %p186, %p187
      %p189 = scmp.ne.s32.totalorder %s181, %s183
      %p190 = scmp.eq.s32.totalorder %s26, 1
      %p191 = por %p189, %p190
      %p192 = scmp.ne.s32.totalorder %s183, %s184
      %p193 = scmp.eq.s32.totalorder %s26, 0
      %p194 = por %p192, %p193
      %p195 = scmp.ne.s32.totalorder %s183, %s184
      %p196 = scmp.eq.s32.totalorder %s27, 1
      %p197 = por %p195, %p196
      %p199 = scmp.ne.s32.totalorder %s184, %s198
      %p200 = scmp.eq.s32.totalorder %s27, 0
      %p201 = por %p199, %p200
      %p202 = scmp.le.s32.totalorder 1, %s21
      %p203 = scmp.lt.s32.totalorder %s21, 3
      %p204 = pnand %p202, %p203
      %p205 = pneg %p204
      // Predicated region
      $region9: #{tpu_custom_call.1} parent=5 // pred_check
        _
      $region10: #{tpu_custom_call.1} parent=5 // pred_check_branch
        %207 = sbr.rel (%p204) target = $region12
      $region11: #{tpu_custom_call.1} parent=5 // pred_region
        %s208 = ssub.s32 %s21, 1
        // Predicated region
        $region13: #{tpu_custom_call.1} parent=11 // pred_check
          %p209 = pneg %p68
        $region14: #{tpu_custom_call.1} parent=11 // pred_check_branch
          %211 = sbr.rel (%p209) target = $region16
        $region15: #{tpu_custom_call.1} parent=11 // pred_region
          %s213 = ssub.s32 1024, 1024
          %214 = vsyncadd [#allocation7], %s213
          %s215 = sshll.u32 [#allocation6], 4
          %s216 = int_to_ptr.vmem [resolvable:$true] %s215
          %221 = dma.hbm_to_vmem [thread:$0]  %s1, 1024, %s216, [#allocation7], 256, 256, 16
        $region16: #{tpu_custom_call.1} parent=11 // pred_fallthru
          _
        // Predicated region
        $region17: #{tpu_custom_call.1} parent=11 // pred_check
          %p222 = pneg %p89
        $region18: #{tpu_custom_call.1} parent=11 // pred_check_branch
          %224 = sbr.rel (%p222) target = $region20
        $region19: #{tpu_custom_call.1} parent=11 // pred_region
          %s226 = ssub.s32 8192, 8192
          %227 = vsyncadd [#allocation7], %s226
          %s228 = sshll.u32 [#allocation8], 4
          %s229 = int_to_ptr.vmem [resolvable:$true] %s228
          %234 = dma.hbm_to_vmem [thread:$0]  %s2, 8192, %s229, [#allocation7], 128, 128, 8
        $region20: #{tpu_custom_call.1} parent=11 // pred_fallthru
          _
        // Predicated region
        $region21: #{tpu_custom_call.1} parent=11 // pred_check
          %p235 = pneg %p110
        $region22: #{tpu_custom_call.1} parent=11 // pred_check_branch
          %237 = sbr.rel (%p235) target = $region24
        $region23: #{tpu_custom_call.1} parent=11 // pred_region
          %s239 = ssub.s32 8192, 8192
          %240 = vsyncadd [#allocation10], %s239
          %s241 = sshll.u32 [#allocation9], 4
          %s242 = int_to_ptr.vmem [resolvable:$true] %s241
          %247 = dma.hbm_to_vmem [thread:$0]  %s3, 8192, %s242, [#allocation10], 128, 128, 8
        $region24: #{tpu_custom_call.1} parent=11 // pred_fallthru
          _
        // Predicated region
        $region25: #{tpu_custom_call.1} parent=11 // pred_check
          %p248 = pneg %p131
        $region26: #{tpu_custom_call.1} parent=11 // pred_check_branch
          %250 = sbr.rel (%p248) target = $region28
        $region27: #{tpu_custom_call.1} parent=11 // pred_region
          _
        $region28: #{tpu_custom_call.1} parent=11 // pred_fallthru
          _
      $region12: #{tpu_custom_call.1} parent=5 // pred_fallthru
        _
      %p251 = scmp.lt.s32.totalorder %s21, 2
      // Predicated region
      $region29: #{tpu_custom_call.1} parent=5 // pred_check
        %p252 = pneg %p251
      $region30: #{tpu_custom_call.1} parent=5 // pred_check_branch
        %254 = sbr.rel (%p252) target = $region32
      $region31: #{tpu_custom_call.1} parent=5 // pred_region
        // Predicated region
        $region33: #{tpu_custom_call.1} parent=31 // pred_check
          %p255 = pneg %p41
        $region34: #{tpu_custom_call.1} parent=31 // pred_check_branch
          %257 = sbr.rel (%p255) target = $region36
        $region35: #{tpu_custom_call.1} parent=31 // pred_region
          #allocation16 [shape = 'u32[6]{0}', space=smem, size = 0x18, scoped, tag = 'DMA stride descriptor']
          %s258 = sand.u32 %s31, 1
          %s259 = scalar_lea.sflag [#allocation4], %s258
          %s260 = sand.u32 %s31, 1
          %s261 = smul.addr %s260, 128
          %s262 = scalar_lea.vmem [#allocation3], %s261
          %s263 = smul.u32 4, %s21
          %s265 = ssub.s32 2048, 2048
          %266 = vsyncadd %s259, %s265
          %s267 = smul.addr %s263, 4
          %s268 = smul.addr %s267, 64
          %s269 = scalar_lea.hbm %s0, %s268
          %s271 = sshll.u32 1, 14
          %s272 = sxor.u32 4294967295, %s271
          %s274 = sld [smem:[#allocation0]]
          %s275 = sadd.s32 2, %s274
          %s277 = sshll.u32 7, 26
          %s278 = sxor.u32 4294967295, %s277
          %s279 = sand.u32 0, %s278
          %s280 = sshll.u32 %s275, 26
          %s281 = sor.u32 %s279, %s280
          %s282 = sshll.u32 %s262, 4
          %s283 = int_to_ptr.vmem [resolvable:$true] %s282
          %289 = sst [smem:[#allocation16]] 2048
          %s290 = scalar_lea.smem [#allocation16], 1
          %291 = sst [smem:[%s290]] 1024
          %s292 = scalar_lea.smem [#allocation16], 2
          %293 = sst [smem:[%s292]] 4
          %s294 = scalar_lea.smem [#allocation16], 3
          %295 = sst [smem:[%s294]] 256
          %s296 = scalar_lea.smem [#allocation16], 4
          %297 = sst [smem:[%s296]] 256
          %s298 = scalar_lea.smem [#allocation16], 5
          %299 = sst [smem:[%s298]] 16
          %301 = dma.general %s269, 2048, %s283, %s259, [#allocation15], [#allocation16], %s281, 0
        $region36: #{tpu_custom_call.1} parent=31 // pred_fallthru
          _
      $region32: #{tpu_custom_call.1} parent=5 // pred_fallthru
        _
      %p302 = scmp.le.s32.totalorder 1, %s21
      %p303 = scmp.lt.s32.totalorder %s21, 3
      %p304 = pnand %p302, %p303
      %p305 = pneg %p304
      // Predicated region
      $region37: #{tpu_custom_call.1} parent=5 // pred_check
        _
      $region38: #{tpu_custom_call.1} parent=5 // pred_check_branch
        %307 = sbr.rel (%p304) target = $region40
      $region39: #{tpu_custom_call.1} parent=5 // pred_region
        %s308 = ssub.s32 %s21, 1
        %s309 = sand.u32 %s34, 1
        %s310 = scalar_lea.sflag [#allocation4], %s309
        %s311 = sand.u32 %s34, 1
        %s312 = smul.addr %s311, 128
        %s313 = scalar_lea.vmem [#allocation3], %s312
        // Predicated region
        $region41: #{tpu_custom_call.1} parent=39 // pred_check
          %p314 = pneg %p47
        $region42: #{tpu_custom_call.1} parent=39 // pred_check_branch
          %316 = sbr.rel (%p314) target = $region44
        $region43: #{tpu_custom_call.1} parent=39 // pred_region
          %317 = dma.done %s310, 2048
        $region44: #{tpu_custom_call.1} parent=39 // pred_fallthru
          _
        // Predicated region
        $region45: #{tpu_custom_call.1} parent=39 // pred_check
          %p318 = pneg %p68
        $region46: #{tpu_custom_call.1} parent=39 // pred_check_branch
          %320 = sbr.rel (%p318) target = $region48
        $region47: #{tpu_custom_call.1} parent=39 // pred_region
          %321 = dma.done [#allocation7], 1024
        $region48: #{tpu_custom_call.1} parent=39 // pred_fallthru
          _
        // Predicated region
        $region49: #{tpu_custom_call.1} parent=39 // pred_check
          %p322 = pneg %p89
        $region50: #{tpu_custom_call.1} parent=39 // pred_check_branch
          %324 = sbr.rel (%p322) target = $region52
        $region51: #{tpu_custom_call.1} parent=39 // pred_region
          %325 = dma.done [#allocation7], 8192
        $region52: #{tpu_custom_call.1} parent=39 // pred_fallthru
          _
        // Predicated region
        $region53: #{tpu_custom_call.1} parent=39 // pred_check
          %p326 = pneg %p110
        $region54: #{tpu_custom_call.1} parent=39 // pred_check_branch
          %328 = sbr.rel (%p326) target = $region56
        $region55: #{tpu_custom_call.1} parent=39 // pred_region
          %329 = dma.done [#allocation10], 8192
        $region56: #{tpu_custom_call.1} parent=39 // pred_fallthru
          _
        %s330 = sand.u32 %s34, 1
        %s331 = scalar_lea.sflag [#allocation4], %s330
        %s332 = sand.u32 %s34, 1
        %s333 = smul.addr %s332, 128
        %s334 = scalar_lea.vmem [#allocation3], %s333
        %p335 = pneg %p47
        %p336 = pneg %p44
        %p337 = pneg %p68
        %p338 = pneg %p65
        %p339 = pneg %p89
        %p340 = pneg %p86
        %p341 = pneg %p110
        %p342 = pneg %p107
        %p343 = pneg %p131
        %p344 = pneg %p128
        %p345 = pneg %p152
        %p346 = pneg %p149
        %p347 = pneg %p173
        %p348 = pneg %p170
        %p349 = pneg %p194
        %p350 = pneg %p191
        %s351 = smul.u32 4, %s26
        %p352 = scmp.eq.s32.totalorder %s26, 0
        // Predicated region
        $region57: #{tpu_custom_call.1} parent=39 // pred_check
          %p353 = pneg %p352
        $region58: #{tpu_custom_call.1} parent=39 // pred_check_branch
          %355 = sbr.rel (%p353) target = $region60
        $region59: #{tpu_custom_call.1} parent=39 // pred_region
          %356 = vst [vmem:[#allocation2] sm:$0xff] 0.0
        $region60: #{tpu_custom_call.1} parent=39 // pred_fallthru
          _
        %v357 = vld [vmem:[#allocation2] sm:$0xff]
        %v358 = vld [vmem:[%s313] sm:$0xff]
        %v359 = vld [vmem:[%s313 + $0x8] sm:$0xff]
        %v360 = vld [vmem:[%s313 + $0x10] sm:$0xff]
        %v361 = vld [vmem:[%s313 + $0x18] sm:$0xff]
        %v362 = vld [vmem:[%s313 + $0x20] sm:$0xff]
        %v363 = vld [vmem:[%s313 + $0x28] sm:$0xff]
        %v364 = vld [vmem:[%s313 + $0x30] sm:$0xff]
        %v365 = vld [vmem:[%s313 + $0x38] sm:$0xff]
        %v366 = vld [vmem:[%s313 + $0x40] sm:$0xff]
        %v367 = vld [vmem:[%s313 + $0x48] sm:$0xff]
        %v368 = vld [vmem:[%s313 + $0x50] sm:$0xff]
        %v369 = vld [vmem:[%s313 + $0x58] sm:$0xff]
        %v370 = vld [vmem:[%s313 + $0x60] sm:$0xff]
        %v371 = vld [vmem:[%s313 + $0x68] sm:$0xff]
        %v372 = vld [vmem:[%s313 + $0x70] sm:$0xff]
        %v373 = vld [vmem:[%s313 + $0x78] sm:$0xff]
        %v374 = vunpack.c.l.bf16 %v358
        %v375 = vunpack.c.h.bf16 %v358
        %v376 = vunpack.c.l.bf16 %v359
        %v377 = vunpack.c.h.bf16 %v359
        %v378 = vunpack.c.l.bf16 %v360
        %v379 = vunpack.c.h.bf16 %v360
        %v380 = vunpack.c.l.bf16 %v361
        %v381 = vunpack.c.h.bf16 %v361
        %v382 = vunpack.c.l.bf16 %v362
        %v383 = vunpack.c.h.bf16 %v362
        %v384 = vunpack.c.l.bf16 %v363
        %v385 = vunpack.c.h.bf16 %v363
        %v386 = vunpack.c.l.bf16 %v364
        %v387 = vunpack.c.h.bf16 %v364
        %v388 = vunpack.c.l.bf16 %v365
        %v389 = vunpack.c.h.bf16 %v365
        %v390 = vunpack.c.l.bf16 %v366
        %v391 = vunpack.c.h.bf16 %v366
        %v392 = vunpack.c.l.bf16 %v367
        %v393 = vunpack.c.h.bf16 %v367
        %v394 = vunpack.c.l.bf16 %v368
        %v395 = vunpack.c.h.bf16 %v368
        %v396 = vunpack.c.l.bf16 %v369
        %v397 = vunpack.c.h.bf16 %v369
        %v398 = vunpack.c.l.bf16 %v370
        %v399 = vunpack.c.h.bf16 %v370
        %v400 = vunpack.c.l.bf16 %v371
        %v401 = vunpack.c.h.bf16 %v371
        %v402 = vunpack.c.l.bf16 %v372
        %v403 = vunpack.c.h.bf16 %v372
        %v404 = vunpack.c.l.bf16 %v373
        %v405 = vunpack.c.h.bf16 %v373
        %v406 = vadd.f32 %v374, %v378
        %v407 = vadd.f32 %v406, %v382
        %v408 = vadd.f32 %v407, %v386
        %v409 = vrot.slane %v408, 4
        %v410 = vadd.f32 %v408, %v409
        %v411 = vrot.slane %v410, 2
        %v412 = vadd.f32 %v410, %v411
        %v413 = vrot.slane %v412, 1
        %v414 = vadd.f32 %v412, %v413
        %v415 = vadd.f32 %v375, %v379
        %v416 = vadd.f32 %v415, %v383
        %v417 = vadd.f32 %v416, %v387
        %v418 = vrot.slane %v417, 4
        %v419 = vadd.f32 %v417, %v418
        %v420 = vrot.slane %v419, 2
        %v421 = vadd.f32 %v419, %v420
        %v422 = vrot.slane %v421, 1
        %v423 = vadd.f32 %v421, %v422
        %v424 = vadd.f32 %v376, %v380
        %v425 = vadd.f32 %v424, %v384
        %v426 = vadd.f32 %v425, %v388
        %v427 = vrot.slane %v426, 4
        %v428 = vadd.f32 %v426, %v427
        %v429 = vrot.slane %v428, 2
        %v430 = vadd.f32 %v428, %v429
        %v431 = vrot.slane %v430, 1
        %v432 = vadd.f32 %v430, %v431
        %v433 = vadd.f32 %v377, %v381
        %v434 = vadd.f32 %v433, %v385
        %v435 = vadd.f32 %v434, %v389
        %v436 = vrot.slane %v435, 4
        %v437 = vadd.f32 %v435, %v436
        %v438 = vrot.slane %v437, 2
        %v439 = vadd.f32 %v437, %v438
        %v440 = vrot.slane %v439, 1
        %v441 = vadd.f32 %v439, %v440
        %v442 = vadd.f32 %v390, %v394
        %v443 = vadd.f32 %v442, %v398
        %v444 = vadd.f32 %v443, %v402
        %v445 = vrot.slane %v444, 4
        %v446 = vadd.f32 %v444, %v445
        %v447 = vrot.slane %v446, 2
        %v448 = vadd.f32 %v446, %v447
        %v449 = vrot.slane %v448, 1
        %v450 = vadd.f32 %v448, %v449
        %v451 = vadd.f32 %v391, %v395
        %v452 = vadd.f32 %v451, %v399
        %v453 = vadd.f32 %v452, %v403
        %v454 = vrot.slane %v453, 4
        %v455 = vadd.f32 %v453, %v454
        %v456 = vrot.slane %v455, 2
        %v457 = vadd.f32 %v455, %v456
        %v458 = vrot.slane %v457, 1
        %v459 = vadd.f32 %v457, %v458
        %v460 = vadd.f32 %v392, %v396
        %v461 = vadd.f32 %v460, %v400
        %v462 = vadd.f32 %v461, %v404
        %v463 = vrot.slane %v462, 4
        %v464 = vadd.f32 %v462, %v463
        %v465 = vrot.slane %v464, 2
        %v466 = vadd.f32 %v464, %v465
        %v467 = vrot.slane %v466, 1
        %v468 = vadd.f32 %v466, %v467
        %v469 = vadd.f32 %v393, %v397
        %v470 = vadd.f32 %v469, %v401
        %v471 = vadd.f32 %v470, %v405
        %v472 = vrot.slane %v471, 4
        %v473 = vadd.f32 %v471, %v472
        %v474 = vrot.slane %v473, 2
        %v475 = vadd.f32 %v473, %v474
        %v476 = vrot.slane %v475, 1
        %v477 = vadd.f32 %v475, %v476
        %v486 = vcombine.low %v414, %v423
        %v487 = vcombine.low %v432, %v441
        %v489 = vunpack.c.l.s4 1983009808
        %v490 = vunpack.c.0.s8 %v489
        %v491 = vlaneseq
        %v492 = vshrl.u32 %v491, 7
        %v493 = vsub.s32 %v490, %v492
        %v494 = vrot.slane %v486, %v493
        %v496 = vunpack.c.l.s4 1983009808
        %v497 = vunpack.c.0.s8 %v496
        %v498 = vlaneseq
        %v499 = vshrl.u32 %v498, 7
        %v500 = vsub.s32 %v497, %v499
        %v501 = vrot.slane %v487, %v500
        %v502 = vcombine.low %v494, %v501
        %v503 = vcombine.low %v450, %v459
        %v504 = vcombine.low %v468, %v477
        %v506 = vunpack.c.l.s4 1983009808
        %v507 = vunpack.c.0.s8 %v506
        %v508 = vlaneseq
        %v509 = vshrl.u32 %v508, 7
        %v510 = vsub.s32 %v507, %v509
        %v511 = vrot.slane %v503, %v510
        %v513 = vunpack.c.l.s4 1983009808
        %v514 = vunpack.c.0.s8 %v513
        %v515 = vlaneseq
        %v516 = vshrl.u32 %v515, 7
        %v517 = vsub.s32 %v514, %v516
        %v518 = vrot.slane %v504, %v517
        %v519 = vcombine.low %v511, %v518
        %vm520 = vcmask 1044484
        %v521 = vsel %vm520, %v502, %v502
        %vm522 = vcmask 1046534
        %v523 = vsel %vm522, %v502, %v521
        %v524 = vrot.slane %v519, 7
        %vm525 = vcmask 1041409
        %v526 = vsel %vm525, %v524, %v523
        %vm527 = vcmask 1043459
        %v528 = vsel %vm527, %v524, %v526
        %vm529 = vcmask 1045509
        %v530 = vsel %vm529, %v524, %v528
        %vm531 = vcmask 1047559
        %v532 = vsel %vm531, %v524, %v530
        %v534 = vadd.f32 %v357, %v532
        %535 = vst [vmem:[#allocation2] sm:$0xff] %v534
        %p536 = scmp.eq.s32.totalorder %s26, 1
        // Predicated region
        $region61: #{tpu_custom_call.1} parent=39 // pred_check
          %p537 = pneg %p536
        $region62: #{tpu_custom_call.1} parent=39 // pred_check_branch
          %539 = sbr.rel (%p537) target = $region64
        $region63: #{tpu_custom_call.1} parent=39 // pred_region
          %v540 = vld [vmem:[#allocation2] sm:$0xff]
          %v541 = vmul.f32 %v540, 0.015625
          %v542 = vld [vmem:[#allocation6] sm:$0xff]
          %v543 = vld [vmem:[#allocation6 + $0x8] sm:$0xff]
          %v544 = vld [vmem:[#allocation6 + $0x10] sm:$0xff]
          %v545 = vld [vmem:[#allocation6 + $0x18] sm:$0xff]
          %v546 = vld [vmem:[#allocation6 + $0x20] sm:$0xff]
          %v547 = vld [vmem:[#allocation6 + $0x28] sm:$0xff]
          %v548 = vld [vmem:[#allocation6 + $0x30] sm:$0xff]
          %v549 = vld [vmem:[#allocation6 + $0x38] sm:$0xff]
          %v550 = vunpack.c.l.bf16 %v542
          %v551 = vunpack.c.h.bf16 %v542
          %v552 = vunpack.c.l.bf16 %v543
          %v553 = vunpack.c.h.bf16 %v543
          %v554 = vunpack.c.l.bf16 %v544
          %v555 = vunpack.c.h.bf16 %v544
          %v556 = vunpack.c.l.bf16 %v545
          %v557 = vunpack.c.h.bf16 %v545
          %v558 = vunpack.c.l.bf16 %v546
          %v559 = vunpack.c.h.bf16 %v546
          %v560 = vunpack.c.l.bf16 %v547
          %v561 = vunpack.c.h.bf16 %v547
          %v562 = vunpack.c.l.bf16 %v548
          %v563 = vunpack.c.h.bf16 %v548
          %v564 = vunpack.c.l.bf16 %v549
          %v565 = vunpack.c.h.bf16 %v549
          %v566 = vadd.f32 %v550, %v554
          %v567 = vrot.slane %v566, 4
          %v568 = vadd.f32 %v566, %v567
          %v569 = vrot.slane %v568, 2
          %v570 = vadd.f32 %v568, %v569
          %v571 = vrot.slane %v570, 1
          %v572 = vadd.f32 %v570, %v571
          %v573 = vadd.f32 %v551, %v555
          %v574 = vrot.slane %v573, 4
          %v575 = vadd.f32 %v573, %v574
          %v576 = vrot.slane %v575, 2
          %v577 = vadd.f32 %v575, %v576
          %v578 = vrot.slane %v577, 1
          %v579 = vadd.f32 %v577, %v578
          %v580 = vadd.f32 %v552, %v556
          %v581 = vrot.slane %v580, 4
          %v582 = vadd.f32 %v580, %v581
          %v583 = vrot.slane %v582, 2
          %v584 = vadd.f32 %v582, %v583
          %v585 = vrot.slane %v584, 1
          %v586 = vadd.f32 %v584, %v585
          %v587 = vadd.f32 %v553, %v557
          %v588 = vrot.slane %v587, 4
          %v589 = vadd.f32 %v587, %v588
          %v590 = vrot.slane %v589, 2
          %v591 = vadd.f32 %v589, %v590
          %v592 = vrot.slane %v591, 1
          %v593 = vadd.f32 %v591, %v592
          %v594 = vadd.f32 %v558, %v562
          %v595 = vrot.slane %v594, 4
          %v596 = vadd.f32 %v594, %v595
          %v597 = vrot.slane %v596, 2
          %v598 = vadd.f32 %v596, %v597
          %v599 = vrot.slane %v598, 1
          %v600 = vadd.f32 %v598, %v599
          %v601 = vadd.f32 %v559, %v563
          %v602 = vrot.slane %v601, 4
          %v603 = vadd.f32 %v601, %v602
          %v604 = vrot.slane %v603, 2
          %v605 = vadd.f32 %v603, %v604
          %v606 = vrot.slane %v605, 1
          %v607 = vadd.f32 %v605, %v606
          %v608 = vadd.f32 %v560, %v564
          %v609 = vrot.slane %v608, 4
          %v610 = vadd.f32 %v608, %v609
          %v611 = vrot.slane %v610, 2
          %v612 = vadd.f32 %v610, %v611
          %v613 = vrot.slane %v612, 1
          %v614 = vadd.f32 %v612, %v613
          %v615 = vadd.f32 %v561, %v565
          %v616 = vrot.slane %v615, 4
          %v617 = vadd.f32 %v615, %v616
          %v618 = vrot.slane %v617, 2
          %v619 = vadd.f32 %v617, %v618
          %v620 = vrot.slane %v619, 1
          %v621 = vadd.f32 %v619, %v620
          %v622 = vmul.f32 %v572, 0.0625
          %v623 = vmul.f32 %v579, 0.0625
          %v624 = vmul.f32 %v586, 0.0625
          %v625 = vmul.f32 %v593, 0.0625
          %v626 = vmul.f32 %v600, 0.0625
          %v627 = vmul.f32 %v607, 0.0625
          %v628 = vmul.f32 %v614, 0.0625
          %v629 = vmul.f32 %v621, 0.0625
          %630 = vst [vmem:[#allocation11] sm:$0xff] %v541
          %v639 = vcombine.low %v622, %v623
          %v640 = vcombine.low %v624, %v625
          %v642 = vunpack.c.l.s4 1983009808
          %v643 = vunpack.c.0.s8 %v642
          %v644 = vlaneseq
          %v645 = vshrl.u32 %v644, 7
          %v646 = vsub.s32 %v643, %v645
          %v647 = vrot.slane %v639, %v646
          %v649 = vunpack.c.l.s4 1983009808
          %v650 = vunpack.c.0.s8 %v649
          %v651 = vlaneseq
          %v652 = vshrl.u32 %v651, 7
          %v653 = vsub.s32 %v650, %v652
          %v654 = vrot.slane %v640, %v653
          %v655 = vcombine.low %v647, %v654
          %v656 = vcombine.low %v626, %v627
          %v657 = vcombine.low %v628, %v629
          %v659 = vunpack.c.l.s4 1983009808
          %v660 = vunpack.c.0.s8 %v659
          %v661 = vlaneseq
          %v662 = vshrl.u32 %v661, 7
          %v663 = vsub.s32 %v660, %v662
          %v664 = vrot.slane %v656, %v663
          %v666 = vunpack.c.l.s4 1983009808
          %v667 = vunpack.c.0.s8 %v666
          %v668 = vlaneseq
          %v669 = vshrl.u32 %v668, 7
          %v670 = vsub.s32 %v667, %v669
          %v671 = vrot.slane %v657, %v670
          %v672 = vcombine.low %v664, %v671
          %v673 = vsel %vm520, %v655, %v655
          %v674 = vsel %vm522, %v655, %v673
          %v675 = vrot.slane %v672, 7
          %v676 = vsel %vm525, %v675, %v674
          %v677 = vsel %vm527, %v675, %v676
          %v678 = vsel %vm529, %v675, %v677
          %v679 = vsel %vm531, %v675, %v678
          %681 = vst [vmem:[#allocation12] sm:$0xff] %v679
          %v682 = vld [vmem:[#allocation8] sm:$0xff]
          %v683 = vld [vmem:[#allocation8 + $0x8] sm:$0xff]
          %v684 = vld [vmem:[#allocation8 + $0x10] sm:$0xff]
          %v685 = vld [vmem:[#allocation8 + $0x18] sm:$0xff]
          %v686 = vld [vmem:[#allocation8 + $0x20] sm:$0xff]
          %v687 = vld [vmem:[#allocation8 + $0x28] sm:$0xff]
          %v688 = vld [vmem:[#allocation8 + $0x30] sm:$0xff]
          %v689 = vld [vmem:[#allocation8 + $0x38] sm:$0xff]
          %v690 = vld [vmem:[#allocation8 + $0x40] sm:$0xff]
          %v691 = vld [vmem:[#allocation8 + $0x48] sm:$0xff]
          %v692 = vld [vmem:[#allocation8 + $0x50] sm:$0xff]
          %v693 = vld [vmem:[#allocation8 + $0x58] sm:$0xff]
          %v694 = vld [vmem:[#allocation8 + $0x60] sm:$0xff]
          %v695 = vld [vmem:[#allocation8 + $0x68] sm:$0xff]
          %v696 = vld [vmem:[#allocation8 + $0x70] sm:$0xff]
          %v697 = vld [vmem:[#allocation8 + $0x78] sm:$0xff]
          %v698 = vld [vmem:[#allocation8 + $0x80] sm:$0xff]
          %v699 = vld [vmem:[#allocation8 + $0x88] sm:$0xff]
          %v700 = vld [vmem:[#allocation8 + $0x90] sm:$0xff]
          %v701 = vld [vmem:[#allocation8 + $0x98] sm:$0xff]
          %v702 = vld [vmem:[#allocation8 + $0xa0] sm:$0xff]
          %v703 = vld [vmem:[#allocation8 + $0xa8] sm:$0xff]
          %v704 = vld [vmem:[#allocation8 + $0xb0] sm:$0xff]
          %v705 = vld [vmem:[#allocation8 + $0xb8] sm:$0xff]
          %v706 = vld [vmem:[#allocation8 + $0xc0] sm:$0xff]
          %v707 = vld [vmem:[#allocation8 + $0xc8] sm:$0xff]
          %v708 = vld [vmem:[#allocation8 + $0xd0] sm:$0xff]
          %v709 = vld [vmem:[#allocation8 + $0xd8] sm:$0xff]
          %v710 = vld [vmem:[#allocation8 + $0xe0] sm:$0xff]
          %v711 = vld [vmem:[#allocation8 + $0xe8] sm:$0xff]
          %v712 = vld [vmem:[#allocation8 + $0xf0] sm:$0xff]
          %v713 = vld [vmem:[#allocation8 + $0xf8] sm:$0xff]
          %v714 = vld [vmem:[#allocation8 + $0x100] sm:$0xff]
          %v715 = vld [vmem:[#allocation8 + $0x108] sm:$0xff]
          %v716 = vld [vmem:[#allocation8 + $0x110] sm:$0xff]
          %v717 = vld [vmem:[#allocation8 + $0x118] sm:$0xff]
          %v718 = vld [vmem:[#allocation8 + $0x120] sm:$0xff]
          %v719 = vld [vmem:[#allocation8 + $0x128] sm:$0xff]
          %v720 = vld [vmem:[#allocation8 + $0x130] sm:$0xff]
          %v721 = vld [vmem:[#allocation8 + $0x138] sm:$0xff]
          %v722 = vld [vmem:[#allocation8 + $0x140] sm:$0xff]
          %v723 = vld [vmem:[#allocation8 + $0x148] sm:$0xff]
          %v724 = vld [vmem:[#allocation8 + $0x150] sm:$0xff]
          %v725 = vld [vmem:[#allocation8 + $0x158] sm:$0xff]
          %v726 = vld [vmem:[#allocation8 + $0x160] sm:$0xff]
          %v727 = vld [vmem:[#allocation8 + $0x168] sm:$0xff]
          %v728 = vld [vmem:[#allocation8 + $0x170] sm:$0xff]
          %v729 = vld [vmem:[#allocation8 + $0x178] sm:$0xff]
          %v730 = vld [vmem:[#allocation8 + $0x180] sm:$0xff]
          %v731 = vld [vmem:[#allocation8 + $0x188] sm:$0xff]
          %v732 = vld [vmem:[#allocation8 + $0x190] sm:$0xff]
          %v733 = vld [vmem:[#allocation8 + $0x198] sm:$0xff]
          %v734 = vld [vmem:[#allocation8 + $0x1a0] sm:$0xff]
          %v735 = vld [vmem:[#allocation8 + $0x1a8] sm:$0xff]
          %v736 = vld [vmem:[#allocation8 + $0x1b0] sm:$0xff]
          %v737 = vld [vmem:[#allocation8 + $0x1b8] sm:$0xff]
          %v738 = vld [vmem:[#allocation8 + $0x1c0] sm:$0xff]
          %v739 = vld [vmem:[#allocation8 + $0x1c8] sm:$0xff]
          %v740 = vld [vmem:[#allocation8 + $0x1d0] sm:$0xff]
          %v741 = vld [vmem:[#allocation8 + $0x1d8] sm:$0xff]
          %v742 = vld [vmem:[#allocation8 + $0x1e0] sm:$0xff]
          %v743 = vld [vmem:[#allocation8 + $0x1e8] sm:$0xff]
          %v744 = vld [vmem:[#allocation8 + $0x1f0] sm:$0xff]
          %v745 = vld [vmem:[#allocation8 + $0x1f8] sm:$0xff]
          %v746 = vld [vmem:[#allocation9] sm:$0xff]
          %v747 = vld [vmem:[#allocation9 + $0x8] sm:$0xff]
          %v748 = vld [vmem:[#allocation9 + $0x10] sm:$0xff]
          %v749 = vld [vmem:[#allocation9 + $0x18] sm:$0xff]
          %v750 = vld [vmem:[#allocation9 + $0x20] sm:$0xff]
          %v751 = vld [vmem:[#allocation9 + $0x28] sm:$0xff]
          %v752 = vld [vmem:[#allocation9 + $0x30] sm:$0xff]
          %v753 = vld [vmem:[#allocation9 + $0x38] sm:$0xff]
          %v754 = vld [vmem:[#allocation9 + $0x40] sm:$0xff]
          %v755 = vld [vmem:[#allocation9 + $0x48] sm:$0xff]
          %v756 = vld [vmem:[#allocation9 + $0x50] sm:$0xff]
          %v757 = vld [vmem:[#allocation9 + $0x58] sm:$0xff]
          %v758 = vld [vmem:[#allocation9 + $0x60] sm:$0xff]
          %v759 = vld [vmem:[#allocation9 + $0x68] sm:$0xff]
          %v760 = vld [vmem:[#allocation9 + $0x70] sm:$0xff]
          %v761 = vld [vmem:[#allocation9 + $0x78] sm:$0xff]
          %v762 = vld [vmem:[#allocation9 + $0x80] sm:$0xff]
          %v763 = vld [vmem:[#allocation9 + $0x88] sm:$0xff]
          %v764 = vld [vmem:[#allocation9 + $0x90] sm:$0xff]
          %v765 = vld [vmem:[#allocation9 + $0x98] sm:$0xff]
          %v766 = vld [vmem:[#allocation9 + $0xa0] sm:$0xff]
          %v767 = vld [vmem:[#allocation9 + $0xa8] sm:$0xff]
          %v768 = vld [vmem:[#allocation9 + $0xb0] sm:$0xff]
          %v769 = vld [vmem:[#allocation9 + $0xb8] sm:$0xff]
          %v770 = vld [vmem:[#allocation9 + $0xc0] sm:$0xff]
          %v771 = vld [vmem:[#allocation9 + $0xc8] sm:$0xff]
          %v772 = vld [vmem:[#allocation9 + $0xd0] sm:$0xff]
          %v773 = vld [vmem:[#allocation9 + $0xd8] sm:$0xff]
          %v774 = vld [vmem:[#allocation9 + $0xe0] sm:$0xff]
          %v775 = vld [vmem:[#allocation9 + $0xe8] sm:$0xff]
          %v776 = vld [vmem:[#allocation9 + $0xf0] sm:$0xff]
          %v777 = vld [vmem:[#allocation9 + $0xf8] sm:$0xff]
          %v778 = vld [vmem:[#allocation9 + $0x100] sm:$0xff]
          %v779 = vld [vmem:[#allocation9 + $0x108] sm:$0xff]
          %v780 = vld [vmem:[#allocation9 + $0x110] sm:$0xff]
          %v781 = vld [vmem:[#allocation9 + $0x118] sm:$0xff]
          %v782 = vld [vmem:[#allocation9 + $0x120] sm:$0xff]
          %v783 = vld [vmem:[#allocation9 + $0x128] sm:$0xff]
          %v784 = vld [vmem:[#allocation9 + $0x130] sm:$0xff]
          %v785 = vld [vmem:[#allocation9 + $0x138] sm:$0xff]
          %v786 = vld [vmem:[#allocation9 + $0x140] sm:$0xff]
          %v787 = vld [vmem:[#allocation9 + $0x148] sm:$0xff]
          %v788 = vld [vmem:[#allocation9 + $0x150] sm:$0xff]
          %v789 = vld [vmem:[#allocation9 + $0x158] sm:$0xff]
          %v790 = vld [vmem:[#allocation9 + $0x160] sm:$0xff]
          %v791 = vld [vmem:[#allocation9 + $0x168] sm:$0xff]
          %v792 = vld [vmem:[#allocation9 + $0x170] sm:$0xff]
          %v793 = vld [vmem:[#allocation9 + $0x178] sm:$0xff]
          %v794 = vld [vmem:[#allocation9 + $0x180] sm:$0xff]
          %v795 = vld [vmem:[#allocation9 + $0x188] sm:$0xff]
          %v796 = vld [vmem:[#allocation9 + $0x190] sm:$0xff]
          %v797 = vld [vmem:[#allocation9 + $0x198] sm:$0xff]
          %v798 = vld [vmem:[#allocation9 + $0x1a0] sm:$0xff]
          %v799 = vld [vmem:[#allocation9 + $0x1a8] sm:$0xff]
          %v800 = vld [vmem:[#allocation9 + $0x1b0] sm:$0xff]
          %v801 = vld [vmem:[#allocation9 + $0x1b8] sm:$0xff]
          %v802 = vld [vmem:[#allocation9 + $0x1c0] sm:$0xff]
          %v803 = vld [vmem:[#allocation9 + $0x1c8] sm:$0xff]
          %v804 = vld [vmem:[#allocation9 + $0x1d0] sm:$0xff]
          %v805 = vld [vmem:[#allocation9 + $0x1d8] sm:$0xff]
          %v806 = vld [vmem:[#allocation9 + $0x1e0] sm:$0xff]
          %v807 = vld [vmem:[#allocation9 + $0x1e8] sm:$0xff]
          %v808 = vld [vmem:[#allocation9 + $0x1f0] sm:$0xff]
          %v809 = vld [vmem:[#allocation9 + $0x1f8] sm:$0xff]
          %v810 = vsel %vm525, %v626, %v622
          %v811 = vsel %vm525, %v627, %v623
          %v812 = vsel %vm525, %v628, %v624
          %v813 = vsel %vm525, %v629, %v625
          %818 = vmatprep.subr.mxu0 0.0
          %819 = vmatpush1.msra.mxu0 %v746
          %820 = vmatprep.subr.mxu0 0.0
          %821 = vmatpush1.msra.mxu0 %v747
          %822 = vmatprep.subr.mxu0 0.0
          %823 = vmatpush1.msra.mxu0 %v748
          %824 = vmatprep.subr.mxu0 0.0
          %825 = vmatpush1.msra.mxu0 %v749
          %826 = vmatprep.subr.mxu0 0.0
          %827 = vmatpush1.msra.mxu0 %v750
          %828 = vmatprep.subr.mxu0 0.0
          %829 = vmatpush1.msra.mxu0 %v751
          %830 = vmatprep.subr.mxu0 0.0
          %831 = vmatpush1.msra.mxu0 %v752
          %832 = vmatprep.subr.mxu0 0.0
          %833 = vmatpush1.msra.mxu0 %v753
          %834 = vmatprep.subr.mxu0 0.0
          %835 = vmatpush1.msra.mxu0 %v754
          %836 = vmatprep.subr.mxu0 0.0
          %837 = vmatpush1.msra.mxu0 %v755
          %838 = vmatprep.subr.mxu0 0.0
          %839 = vmatpush1.msra.mxu0 %v756
          %840 = vmatprep.subr.mxu0 0.0
          %841 = vmatpush1.msra.mxu0 %v757
          %842 = vmatprep.subr.mxu0 0.0
          %843 = vmatpush1.msra.mxu0 %v758
          %844 = vmatprep.subr.mxu0 0.0
          %845 = vmatpush1.msra.mxu0 %v759
          %846 = vmatprep.subr.mxu0 0.0
          %847 = vmatpush1.msra.mxu0 %v760
          %848 = vmatprep.subr.mxu0 0.0
          %849 = vmatpush1.msra.mxu0 %v761
          %850 = vmatprep.subr.mxu0 0.0
          %851 = vmatpush1.msra.mxu0 %v762
          %852 = vmatprep.subr.mxu0 0.0
          %853 = vmatpush1.msra.mxu0 %v763
          %854 = vmatprep.subr.mxu0 0.0
          %855 = vmatpush1.msra.mxu0 %v764
          %856 = vmatprep.subr.mxu0 0.0
          %857 = vmatpush1.msra.mxu0 %v765
          %858 = vmatprep.subr.mxu0 0.0
          %859 = vmatpush1.msra.mxu0 %v766
          %860 = vmatprep.subr.mxu0 0.0
          %861 = vmatpush1.msra.mxu0 %v767
          %862 = vmatprep.subr.mxu0 0.0
          %863 = vmatpush1.msra.mxu0 %v768
          %864 = vmatprep.subr.mxu0 0.0
          %865 = vmatpush1.msra.mxu0 %v769
          %866 = vmatprep.subr.mxu0 0.0
          %867 = vmatpush1.msra.mxu0 %v770
          %868 = vmatprep.subr.mxu0 0.0
          %869 = vmatpush1.msra.mxu0 %v771
          %870 = vmatprep.subr.mxu0 0.0
          %871 = vmatpush1.msra.mxu0 %v772
          %872 = vmatprep.subr.mxu0 0.0
          %873 = vmatpush1.msra.mxu0 %v773
          %874 = vmatprep.subr.mxu0 0.0
          %875 = vmatpush1.msra.mxu0 %v774
          %876 = vmatprep.subr.mxu0 0.0
          %877 = vmatpush1.msra.mxu0 %v775
          %878 = vmatprep.subr.mxu0 0.0
          %879 = vmatpush1.msra.mxu0 %v776
          %880 = vmatprep.subr.mxu0 0.0
          %881 = vmatpush1.msra.mxu0 %v777
          %882 = vmatprep.mubr.f32.mxu0 %v811
          %883 = vmatmul.mubr.f32.gmra.mrb[0].mxu0 %v810
          %v884 = vpop.f32.mrb[0].mxu0
          %v885 = vadd.f32 0.0, %v884
          %v886 = vpop.f32.mrb[0].mxu0
          %887 = vdwg.mxu0
          %888 = vmatprep.subr.mxu0 0.0
          %889 = vmatpush1.msra.mxu0 %v778
          %890 = vmatprep.subr.mxu0 0.0
          %891 = vmatpush1.msra.mxu0 %v779
          %892 = vmatprep.subr.mxu0 0.0
          %893 = vmatpush1.msra.mxu0 %v780
          %894 = vmatprep.subr.mxu0 0.0
          %895 = vmatpush1.msra.mxu0 %v781
          %896 = vmatprep.subr.mxu0 0.0
          %897 = vmatpush1.msra.mxu0 %v782
          %898 = vmatprep.subr.mxu0 0.0
          %899 = vmatpush1.msra.mxu0 %v783
          %900 = vmatprep.subr.mxu0 0.0
          %901 = vmatpush1.msra.mxu0 %v784
          %902 = vmatprep.subr.mxu0 0.0
          %903 = vmatpush1.msra.mxu0 %v785
          %904 = vmatprep.subr.mxu0 0.0
          %905 = vmatpush1.msra.mxu0 %v786
          %906 = vmatprep.subr.mxu0 0.0
          %907 = vmatpush1.msra.mxu0 %v787
          %908 = vmatprep.subr.mxu0 0.0
          %909 = vmatpush1.msra.mxu0 %v788
          %910 = vmatprep.subr.mxu0 0.0
          %911 = vmatpush1.msra.mxu0 %v789
          %912 = vmatprep.subr.mxu0 0.0
          %913 = vmatpush1.msra.mxu0 %v790
          %914 = vmatprep.subr.mxu0 0.0
          %915 = vmatpush1.msra.mxu0 %v791
          %916 = vmatprep.subr.mxu0 0.0
          %917 = vmatpush1.msra.mxu0 %v792
          %918 = vmatprep.subr.mxu0 0.0
          %919 = vmatpush1.msra.mxu0 %v793
          %920 = vmatprep.subr.mxu0 0.0
          %921 = vmatpush1.msra.mxu0 %v794
          %922 = vmatprep.subr.mxu0 0.0
          %923 = vmatpush1.msra.mxu0 %v795
          %924 = vmatprep.subr.mxu0 0.0
          %925 = vmatpush1.msra.mxu0 %v796
          %926 = vmatprep.subr.mxu0 0.0
          %927 = vmatpush1.msra.mxu0 %v797
          %928 = vmatprep.subr.mxu0 0.0
          %929 = vmatpush1.msra.mxu0 %v798
          %930 = vmatprep.subr.mxu0 0.0
          %931 = vmatpush1.msra.mxu0 %v799
          %932 = vmatprep.subr.mxu0 0.0
          %933 = vmatpush1.msra.mxu0 %v800
          %934 = vmatprep.subr.mxu0 0.0
          %935 = vmatpush1.msra.mxu0 %v801
          %936 = vmatprep.subr.mxu0 0.0
          %937 = vmatpush1.msra.mxu0 %v802
          %938 = vmatprep.subr.mxu0 0.0
          %939 = vmatpush1.msra.mxu0 %v803
          %940 = vmatprep.subr.mxu0 0.0
          %941 = vmatpush1.msra.mxu0 %v804
          %942 = vmatprep.subr.mxu0 0.0
          %943 = vmatpush1.msra.mxu0 %v805
          %944 = vmatprep.subr.mxu0 0.0
          %945 = vmatpush1.msra.mxu0 %v806
          %946 = vmatprep.subr.mxu0 0.0
          %947 = vmatpush1.msra.mxu0 %v807
          %948 = vmatprep.subr.mxu0 0.0
          %949 = vmatpush1.msra.mxu0 %v808
          %950 = vmatprep.subr.mxu0 0.0
          %951 = vmatpush1.msra.mxu0 %v809
          %952 = vmatprep.mubr.f32.mxu0 %v813
          %953 = vmatmul.mubr.f32.gmra.mrb[0].mxu0 %v812
          %v954 = vpop.f32.mrb[0].mxu0
          %v955 = vadd.f32 %v885, %v954
          %v956 = vpop.f32.mrb[0].mxu0
          %957 = vdwg.mxu0
          %v959 = vcombine.high %v541, %v541
          %v961 = vunpack.c.l.s4 1983009808
          %v962 = vunpack.c.0.s8 %v961
          %v963 = vlaneseq
          %v964 = vshrl.u32 %v963, 7
          %v965 = vsub.s32 %v962, %v964
          %v966 = vrot.slane %v541, %v965
          %v968 = vunpack.c.l.s4 1983009808
          %v969 = vunpack.c.0.s8 %v968
          %v970 = vlaneseq
          %v971 = vshrl.u32 %v970, 7
          %v972 = vsub.s32 %v969, %v971
          %v973 = vrot.slane %v959, %v972
          %v974 = vcombine.high %v966, %v966
          %v975 = vcombine.high %v973, %v973
          %980 = vmatprep.subr.mxu0 0.0
          %981 = vmatpush1.msra.mxu0 %v682
          %982 = vmatprep.subr.mxu0 0.0
          %983 = vmatpush1.msra.mxu0 %v683
          %984 = vmatprep.subr.mxu0 0.0
          %985 = vmatpush1.msra.mxu0 %v684
          %986 = vmatprep.subr.mxu0 0.0
          %987 = vmatpush1.msra.mxu0 %v685
          %988 = vmatprep.subr.mxu0 0.0
          %989 = vmatpush1.msra.mxu0 %v686
          %990 = vmatprep.subr.mxu0 0.0
          %991 = vmatpush1.msra.mxu0 %v687
          %992 = vmatprep.subr.mxu0 0.0
          %993 = vmatpush1.msra.mxu0 %v688
          %994 = vmatprep.subr.mxu0 0.0
          %995 = vmatpush1.msra.mxu0 %v689
          %996 = vmatprep.subr.mxu0 0.0
          %997 = vmatpush1.msra.mxu0 %v690
          %998 = vmatprep.subr.mxu0 0.0
          %999 = vmatpush1.msra.mxu0 %v691
          %1000 = vmatprep.subr.mxu0 0.0
          %1001 = vmatpush1.msra.mxu0 %v692
          %1002 = vmatprep.subr.mxu0 0.0
          %1003 = vmatpush1.msra.mxu0 %v693
          %1004 = vmatprep.subr.mxu0 0.0
          %1005 = vmatpush1.msra.mxu0 %v694
          %1006 = vmatprep.subr.mxu0 0.0
          %1007 = vmatpush1.msra.mxu0 %v695
          %1008 = vmatprep.subr.mxu0 0.0
          %1009 = vmatpush1.msra.mxu0 %v696
          %1010 = vmatprep.subr.mxu0 0.0
          %1011 = vmatpush1.msra.mxu0 %v697
          %1012 = vmatprep.subr.mxu0 0.0
          %1013 = vmatpush1.msra.mxu0 %v698
          %1014 = vmatprep.subr.mxu0 0.0
          %1015 = vmatpush1.msra.mxu0 %v699
          %1016 = vmatprep.subr.mxu0 0.0
          %1017 = vmatpush1.msra.mxu0 %v700
          %1018 = vmatprep.subr.mxu0 0.0
          %1019 = vmatpush1.msra.mxu0 %v701
          %1020 = vmatprep.subr.mxu0 0.0
          %1021 = vmatpush1.msra.mxu0 %v702
          %1022 = vmatprep.subr.mxu0 0.0
          %1023 = vmatpush1.msra.mxu0 %v703
          %1024 = vmatprep.subr.mxu0 0.0
          %1025 = vmatpush1.msra.mxu0 %v704
          %1026 = vmatprep.subr.mxu0 0.0
          %1027 = vmatpush1.msra.mxu0 %v705
          %1028 = vmatprep.subr.mxu0 0.0
          %1029 = vmatpush1.msra.mxu0 %v706
          %1030 = vmatprep.subr.mxu0 0.0
          %1031 = vmatpush1.msra.mxu0 %v707
          %1032 = vmatprep.subr.mxu0 0.0
          %1033 = vmatpush1.msra.mxu0 %v708
          %1034 = vmatprep.subr.mxu0 0.0
          %1035 = vmatpush1.msra.mxu0 %v709
          %1036 = vmatprep.subr.mxu0 0.0
          %1037 = vmatpush1.msra.mxu0 %v710
          %1038 = vmatprep.subr.mxu0 0.0
          %1039 = vmatpush1.msra.mxu0 %v711
          %1040 = vmatprep.subr.mxu0 0.0
          %1041 = vmatpush1.msra.mxu0 %v712
          %1042 = vmatprep.subr.mxu0 0.0
          %1043 = vmatpush1.msra.mxu0 %v713
          %1044 = vmatprep.mubr.f32.mxu0 %v974
          %1045 = vmatmul.mubr.f32.gmra.mrb[0].mxu0 %v966
          %v1046 = vpop.f32.mrb[0].mxu0
          %v1047 = vadd.f32 %v955, %v1046
          %v1048 = vpop.f32.mrb[0].mxu0
          %1049 = vdwg.mxu0
          %1050 = vmatprep.subr.mxu0 0.0
          %1051 = vmatpush1.msra.mxu0 %v714
          %1052 = vmatprep.subr.mxu0 0.0
          %1053 = vmatpush1.msra.mxu0 %v715
          %1054 = vmatprep.subr.mxu0 0.0
          %1055 = vmatpush1.msra.mxu0 %v716
          %1056 = vmatprep.subr.mxu0 0.0
          %1057 = vmatpush1.msra.mxu0 %v717
          %1058 = vmatprep.subr.mxu0 0.0
          %1059 = vmatpush1.msra.mxu0 %v718
          %1060 = vmatprep.subr.mxu0 0.0
          %1061 = vmatpush1.msra.mxu0 %v719
          %1062 = vmatprep.subr.mxu0 0.0
          %1063 = vmatpush1.msra.mxu0 %v720
          %1064 = vmatprep.subr.mxu0 0.0
          %1065 = vmatpush1.msra.mxu0 %v721
          %1066 = vmatprep.subr.mxu0 0.0
          %1067 = vmatpush1.msra.mxu0 %v722
          %1068 = vmatprep.subr.mxu0 0.0
          %1069 = vmatpush1.msra.mxu0 %v723
          %1070 = vmatprep.subr.mxu0 0.0
          %1071 = vmatpush1.msra.mxu0 %v724
          %1072 = vmatprep.subr.mxu0 0.0
          %1073 = vmatpush1.msra.mxu0 %v725
          %1074 = vmatprep.subr.mxu0 0.0
          %1075 = vmatpush1.msra.mxu0 %v726
          %1076 = vmatprep.subr.mxu0 0.0
          %1077 = vmatpush1.msra.mxu0 %v727
          %1078 = vmatprep.subr.mxu0 0.0
          %1079 = vmatpush1.msra.mxu0 %v728
          %1080 = vmatprep.subr.mxu0 0.0
          %1081 = vmatpush1.msra.mxu0 %v729
          %1082 = vmatprep.subr.mxu0 0.0
          %1083 = vmatpush1.msra.mxu0 %v730
          %1084 = vmatprep.subr.mxu0 0.0
          %1085 = vmatpush1.msra.mxu0 %v731
          %1086 = vmatprep.subr.mxu0 0.0
          %1087 = vmatpush1.msra.mxu0 %v732
          %1088 = vmatprep.subr.mxu0 0.0
          %1089 = vmatpush1.msra.mxu0 %v733
          %1090 = vmatprep.subr.mxu0 0.0
          %1091 = vmatpush1.msra.mxu0 %v734
          %1092 = vmatprep.subr.mxu0 0.0
          %1093 = vmatpush1.msra.mxu0 %v735
          %1094 = vmatprep.subr.mxu0 0.0
          %1095 = vmatpush1.msra.mxu0 %v736
          %1096 = vmatprep.subr.mxu0 0.0
          %1097 = vmatpush1.msra.mxu0 %v737
          %1098 = vmatprep.subr.mxu0 0.0
          %1099 = vmatpush1.msra.mxu0 %v738
          %1100 = vmatprep.subr.mxu0 0.0
          %1101 = vmatpush1.msra.mxu0 %v739
          %1102 = vmatprep.subr.mxu0 0.0
          %1103 = vmatpush1.msra.mxu0 %v740
          %1104 = vmatprep.subr.mxu0 0.0
          %1105 = vmatpush1.msra.mxu0 %v741
          %1106 = vmatprep.subr.mxu0 0.0
          %1107 = vmatpush1.msra.mxu0 %v742
          %1108 = vmatprep.subr.mxu0 0.0
          %1109 = vmatpush1.msra.mxu0 %v743
          %1110 = vmatprep.subr.mxu0 0.0
          %1111 = vmatpush1.msra.mxu0 %v744
          %1112 = vmatprep.subr.mxu0 0.0
          %1113 = vmatpush1.msra.mxu0 %v745
          %1114 = vmatprep.mubr.f32.mxu0 %v975
          %1115 = vmatmul.mubr.f32.gmra.mrb[0].mxu0 %v973
          %v1116 = vpop.f32.mrb[0].mxu0
          %v1117 = vadd.f32 %v1047, %v1116
          %v1118 = vpop.f32.mrb[0].mxu0
          %1119 = vdwg.mxu0
          %v1120 = vld [vmem:[%s4] sm:$0x1]
          %v1122 = vlaneseq
          %v1123 = vshrl.u32 %v1122, 7
          %v1124 = vsub.s32 0, %v1123
          %v1125 = vrot.slane %v1120, %v1124
          %v1127 = vadd.f32 %v1117, %v1125
          %1128 = vst [vmem:[#allocation14] sm:$0x3] %v1127
        $region64: #{tpu_custom_call.1} parent=39 // pred_fallthru
          _
        // Predicated region
        $region65: #{tpu_custom_call.1} parent=39 // pred_check
          %p1129 = pneg %p149
        $region66: #{tpu_custom_call.1} parent=39 // pred_check_branch
          %1131 = sbr.rel (%p1129) target = $region68
        $region67: #{tpu_custom_call.1} parent=39 // pred_region
          %s1133 = ssub.s32 128, 128
          %1134 = vsyncadd [#allocation5], %s1133
          %s1136 = sshll.u32 [#allocation11], 4
          %s1137 = int_to_ptr.vmem [resolvable:$true] %s1136
          %1139 = dma.vmem_to_hbm [thread:$0]  %s1137, 128, %s5, [#allocation5]
        $region68: #{tpu_custom_call.1} parent=39 // pred_fallthru
          _
        // Predicated region
        $region69: #{tpu_custom_call.1} parent=39 // pred_check
          %p1140 = pneg %p170
        $region70: #{tpu_custom_call.1} parent=39 // pred_check_branch
          %1142 = sbr.rel (%p1140) target = $region72
        $region71: #{tpu_custom_call.1} parent=39 // pred_region
          %s1144 = ssub.s32 128, 128
          %1145 = vsyncadd [#allocation13], %s1144
          %s1147 = sshll.u32 [#allocation12], 4
          %s1148 = int_to_ptr.vmem [resolvable:$true] %s1147
          %1150 = dma.vmem_to_hbm [thread:$0]  %s1148, 128, %s6, [#allocation13]
        $region72: #{tpu_custom_call.1} parent=39 // pred_fallthru
          _
        // Predicated region
        $region73: #{tpu_custom_call.1} parent=39 // pred_check
          %p1151 = pneg %p191
        $region74: #{tpu_custom_call.1} parent=39 // pred_check_branch
          %1153 = sbr.rel (%p1151) target = $region76
        $region75: #{tpu_custom_call.1} parent=39 // pred_region
          %s1155 = ssub.s32 32, 32
          %1156 = vsyncadd [#allocation13], %s1155
          %s1158 = sshll.u32 [#allocation14], 4
          %s1159 = int_to_ptr.vmem [resolvable:$true] %s1158
          %1161 = dma.vmem_to_hbm [thread:$0]  %s1159, 32, %s7, [#allocation13]
        $region76: #{tpu_custom_call.1} parent=39 // pred_fallthru
          _
        // Predicated region
        $region77: #{tpu_custom_call.1} parent=39 // pred_check
          %p1162 = pneg %p149
        $region78: #{tpu_custom_call.1} parent=39 // pred_check_branch
          %1164 = sbr.rel (%p1162) target = $region80
        $region79: #{tpu_custom_call.1} parent=39 // pred_region
          %1165 = dma.done [#allocation5], 128
        $region80: #{tpu_custom_call.1} parent=39 // pred_fallthru
          _
        // Predicated region
        $region81: #{tpu_custom_call.1} parent=39 // pred_check
          %p1166 = pneg %p170
        $region82: #{tpu_custom_call.1} parent=39 // pred_check_branch
          %1168 = sbr.rel (%p1166) target = $region84
        $region83: #{tpu_custom_call.1} parent=39 // pred_region
          %1169 = dma.done [#allocation13], 128
        $region84: #{tpu_custom_call.1} parent=39 // pred_fallthru
          _
        // Predicated region
        $region85: #{tpu_custom_call.1} parent=39 // pred_check
          %p1170 = pneg %p191
        $region86: #{tpu_custom_call.1} parent=39 // pred_check_branch
          %1172 = sbr.rel (%p1170) target = $region88
        $region87: #{tpu_custom_call.1} parent=39 // pred_region
          %1173 = dma.done [#allocation13], 32
        $region88: #{tpu_custom_call.1} parent=39 // pred_fallthru
          _
      $region40: #{tpu_custom_call.1} parent=5 // pred_fallthru
        _
      %p1174 = scmp.le.s32.totalorder 2, %s21
      // Predicated region
      $region89: #{tpu_custom_call.1} parent=5 // pred_check
        %p1175 = pneg %p1174
      $region90: #{tpu_custom_call.1} parent=5 // pred_check_branch
        %1177 = sbr.rel (%p1175) target = $region92
      $region91: #{tpu_custom_call.1} parent=5 // pred_region
        %s1178 = ssub.s32 %s21, 2
      $region92: #{tpu_custom_call.1} parent=5 // pred_fallthru
        _
    $region6: #{tpu_custom_call.1} parent=1 // loop_footer
      %s25 = sadd.s32 1, %s21
    $region7: #{tpu_custom_call.1} parent=1 // loop_footer_branch
      %20 = sbr.rel target = $region3
    $region8: #{tpu_custom_call.1} parent=1 // loop_exit
      _
    %1179 = vsyncpa [#allocation4], 1
    %s1180 = scalar_lea.sflag [#allocation4], 1
    %1181 = vsyncpa %s1180, 1
    %1182 = vsyncpa [#allocation7], 1
    %1183 = vsyncpa [#allocation10], 1
    %1184 = vsyncpa [#allocation5], 1
    %s1185 = scalar_lea.sflag [#allocation5], 1
    %1186 = vsyncpa %s1185, 1
    %1187 = vsyncpa [#allocation13], 1

</llo_original>
